<compile_context>
chip_gen: v6e
topology: v6e:2x2x1
jax: 0.10.0
libtpu: 0.0.40
codegen_flags: <defaults>
</compile_context>

<pallas_src>
import functools

import jax
import jax.numpy as jnp
from jax.experimental import pallas as pl
from jax.experimental.pallas import tpu as pltpu


# ---------------------------------------------------------------------------
# Kernels
# ---------------------------------------------------------------------------
def _smooth_circle_tiles_kernel(mean_ref, sigma_ref, color_ref, o_ref, *,
                                width, sub_rows, lane):
    """Dense-tiles path (power-of-two width).

    Output block is (3, sub_rows, lane); the flat row-major pixel index is
    recovered from (sublane, lane) coordinates and mapped back to the
    (row, col) of the width x width image with a shift/mask (pure VPU int
    ops, no relayout).
    """
    W, S, L = width, sub_rows, lane
    i = pl.program_id(0)

    mx = mean_ref[0]
    my = mean_ref[1]
    inv_s = 1.0 / sigma_ref[0]
    norm = inv_s * inv_s * (1.0 / 6.0)          # 1 / (6 * sigma^2)
    scale = 2.0 / (W - 1) if W > 1 else 0.0     # lin[k] = k * scale - 1

    shift = W.bit_length() - 1                  # log2(W)
    sub = jax.lax.broadcasted_iota(jnp.int32, (S, L), 0)
    ln = jax.lax.broadcasted_iota(jnp.int32, (S, L), 1)
    f = (i * S + sub) * L + ln                  # global flat pixel index
    row = f >> shift
    col = f & (W - 1)

    x = row.astype(jnp.float32) * scale - 1.0   # X depends on row
    y = col.astype(jnp.float32) * scale - 1.0   # Y depends on col
    dx = (x - mx) * inv_s
    dy = (y - my) * inv_s
    e = jnp.exp(-(dx * dx + dy * dy))           # (S, L), EUP

    for c in range(3):                          # per-channel scalar coefficient
        o_ref[c, :, :] = (color_ref[c] * norm) * e


def _smooth_circle_rows_kernel(mean_ref, sigma_ref, color_ref, o_ref, *,
                               width, rows_per_block):
    """General-width path: output block is (3, rows_per_block, width)."""
    W, R = width, rows_per_block
    i = pl.program_id(0)

    mx = mean_ref[0]
    my = mean_ref[1]
    inv_s = 1.0 / sigma_ref[0]
    norm = inv_s * inv_s * (1.0 / 6.0)
    scale = 2.0 / (W - 1) if W > 1 else 0.0

    row = jax.lax.broadcasted_iota(jnp.int32, (R, W), 0) + i * R
    col = jax.lax.broadcasted_iota(jnp.int32, (R, W), 1)
    x = row.astype(jnp.float32) * scale - 1.0
    y = col.astype(jnp.float32) * scale - 1.0
    dx = (x - mx) * inv_s
    dy = (y - my) * inv_s
    e = jnp.exp(-(dx * dx + dy * dy))           # (R, W)

    for c in range(3):
        o_ref[c, :, :] = (color_ref[c] * norm) * e


# ---------------------------------------------------------------------------
# Wrapper
# ---------------------------------------------------------------------------
_SMEM_SPEC = pl.BlockSpec(memory_space=pltpu.MemorySpace.SMEM)
_MAX_BLOCK_ELEMS = 256 * 1024   # per-channel f32 elems per block (~1 MiB/ch)


def smooth_circle(mean, sigma, color, width):
    """mean: (2,), sigma: (1,), color: (3,) or (3,1,1) -> (3, W, W) f32."""
    W = int(width)
    mean = jnp.asarray(mean, jnp.float32).reshape(2)
    sigma = jnp.asarray(sigma, jnp.float32).reshape(1)
    color = jnp.asarray(color, jnp.float32).reshape(3)
    params = pltpu.CompilerParams(dimension_semantics=("parallel",))

    if W & (W - 1) == 0:
        # Power-of-two width: emit a fully dense (3, N/L, L) slab.
        N = W * W
        L = 512 if N >= 1024 else N             # lane width (mult of 128 if N>=1024)
        M = N // L                              # sublane rows of the flat image
        S = min(M, max(1, _MAX_BLOCK_ELEMS // L))
        # S is a power of two dividing M; if S < M then S >= 8 (legal block).
        kernel = functools.partial(_smooth_circle_tiles_kernel,
                                   width=W, sub_rows=S, lane=L)
        out = pl.pallas_call(
            kernel,
            out_shape=jax.ShapeDtypeStruct((3, M, L), jnp.float32),
            grid=(M // S,),
            in_specs=[_SMEM_SPEC, _SMEM_SPEC, _SMEM_SPEC],
            out_specs=pl.BlockSpec((3, S, L), lambda i: (0, i, 0)),
            compiler_params=params,
        )(mean, sigma, color)
        return out.reshape(3, W, W)             # row-major metadata reshape

    # General width: tile full rows, lane dim = W (dense when W % 128 == 0).
    R = W
    if W * W > _MAX_BLOCK_ELEMS:
        budget = max(1, _MAX_BLOCK_ELEMS // W)
        for r in range(min(W, budget), 0, -1):
            if W % r == 0 and r % 8 == 0:
                R = r
                break
        # TODO(synk): widths with no multiple-of-8 divisor under the budget fall
        # back to a single large (3, W, W) block and may need a larger vmem limit.
    kernel = functools.partial(_smooth_circle_rows_kernel,
                               width=W, rows_per_block=R)
    return pl.pallas_call(
        kernel,
        out_shape=jax.ShapeDtypeStruct((3, W, W), jnp.float32),
        grid=(W // R,),
        in_specs=[_SMEM_SPEC, _SMEM_SPEC, _SMEM_SPEC],
        out_specs=pl.BlockSpec((3, R, W), lambda i: (0, i, 0)),
        compiler_params=params,
    )(mean, sigma, color)


def smooth_circle_ref(mean, sigma, color, width):
    """Pure-JAX reference mirroring the PyTorch forward."""
    lin = jnp.linspace(-1.0, 1.0, width, dtype=jnp.float32)
    X, Y = jnp.meshgrid(lin, lin, indexing="ij")
    d2 = ((X - mean[0]) / sigma[0]) ** 2 + ((Y - mean[1]) / sigma[0]) ** 2
    z = 1.0 / 6.0 / sigma[0] ** 2 * jnp.exp(-d2)
    return z[None, :, :] * jnp.asarray(color, jnp.float32).reshape(3, 1, 1)


# ---------------------------------------------------------------------------
# Demo / correctness check
# ---------------------------------------------------------------------------
if __name__ == "__main__":
    width = 16  # small spatial size, consistent with the module's `width` arg

    # Deterministic parameter init (shapes as in _SmoothCircle.__init__).
    key = jax.random.PRNGKey(0)
    k_mean, k_sigma, k_color = jax.random.split(key, 3)
    mean = 0.5 * jax.random.normal(k_mean, (2,), dtype=jnp.float32)
    sigma = 0.1 + 0.1 * jax.random.uniform(k_sigma, (1,), dtype=jnp.float32)
    color = jax.random.uniform(k_color, (3,), dtype=jnp.float32)

    # Dense-tiles path, small power-of-two width (lane width = W*W = 256).
    out = jax.block_until_ready(smooth_circle(mean, sigma, color, width))
    ref = smooth_circle_ref(mean, sigma, color, width)
    assert out.shape == (3, width, width)
    assert jnp.allclose(out, ref, rtol=1e-4, atol=1e-5), "tiles path mismatch"

    # Dense-tiles path, power-of-two width using the 512-lane layout.
    w1 = 32
    out1 = jax.block_until_ready(smooth_circle(mean, sigma, color, w1))
    ref1 = smooth_circle_ref(mean, sigma, color, w1)
    assert out1.shape == (3, w1, w1)
    assert jnp.allclose(out1, ref1, rtol=1e-4, atol=1e-5), "tiles-512 mismatch"

    # General-width path (non power-of-two width).
    w2 = 24
    out2 = jax.block_until_ready(smooth_circle(mean, sigma, color, w2))
    ref2 = smooth_circle_ref(mean, sigma, color, w2)
    assert out2.shape == (3, w2, w2)
    assert jnp.allclose(out2, ref2, rtol=1e-4, atol=1e-5), "rows path mismatch"

    print("KERNEL_OK")
</pallas_src>

<mosaic_0001>
module attributes {stable_mosaic.version = 11 : i64} {
  func.func @_smooth_circle_tiles_kernel(%arg0: i32, %arg1: memref<2xf32, #tpu.memory_space<smem>>, %arg2: memref<1xf32, #tpu.memory_space<smem>>, %arg3: memref<3xf32, #tpu.memory_space<smem>>, %arg4: memref<3x1x256xf32, #tpu.memory_space<vmem>>) attributes {dimension_semantics = [#tpu.dimension_semantics<parallel>], iteration_bounds = array<i64: 1>, scalar_prefetch = 0 : i64, scratch_operands = 0 : i64, tpu.core_type = #tpu.core_type<tc>, window_params = [{transform_indices = @transform_0, window_bounds = array<i64: 2>}, {transform_indices = @transform_1, window_bounds = array<i64: 1>}, {transform_indices = @transform_2, window_bounds = array<i64: 3>}, {transform_indices = @transform_3, window_bounds = array<i64: 3, 1, 256>}]} {
    %c0 = arith.constant 0 : index
    %0 = memref.load %arg1[%c0] : memref<2xf32, #tpu.memory_space<smem>>
    %c1 = arith.constant 1 : index
    %1 = memref.load %arg1[%c1] : memref<2xf32, #tpu.memory_space<smem>>
    %c0_0 = arith.constant 0 : index
    %2 = memref.load %arg2[%c0_0] : memref<1xf32, #tpu.memory_space<smem>>
    %cst = arith.constant 1.000000e+00 : f32
    %3 = arith.divf %cst, %2 : f32
    %4 = arith.mulf %3, %3 : f32
    %cst_1 = arith.constant 0.166666672 : f32
    %5 = arith.mulf %4, %cst_1 : f32
    %6 = tpu.iota {dimensions = array<i32: 0>} : vector<1x256xi32>
    %7 = tpu.iota {dimensions = array<i32: 1>} : vector<1x256xi32>
    %c1_i32 = arith.constant 1 : i32
    %8 = arith.muli %arg0, %c1_i32 : i32
    %9 = vector.broadcast %8 : i32 to vector<1x256xi32>
    %10 = arith.addi %9, %6 : vector<1x256xi32>
    %c256_i32 = arith.constant 256 : i32
    %11 = vector.broadcast %c256_i32 : i32 to vector<1x256xi32>
    %12 = arith.muli %10, %11 : vector<1x256xi32>
    %13 = arith.addi %12, %7 : vector<1x256xi32>
    %c4_i32 = arith.constant 4 : i32
    %14 = vector.broadcast %c4_i32 : i32 to vector<1x256xi32>
    %15 = arith.shrsi %13, %14 : vector<1x256xi32>
    %c15_i32 = arith.constant 15 : i32
    %16 = vector.broadcast %c15_i32 : i32 to vector<1x256xi32>
    %17 = arith.andi %13, %16 : vector<1x256xi32>
    %18 = arith.sitofp %15 : vector<1x256xi32> to vector<1x256xf32>
    %cst_2 = arith.constant 0.13333334 : f32
    %19 = vector.broadcast %cst_2 : f32 to vector<1x256xf32>
    %20 = arith.mulf %18, %19 : vector<1x256xf32>
    %cst_3 = arith.constant 1.000000e+00 : f32
    %21 = vector.broadcast %cst_3 : f32 to vector<1x256xf32>
    %22 = arith.subf %20, %21 : vector<1x256xf32>
    %23 = arith.sitofp %17 : vector<1x256xi32> to vector<1x256xf32>
    %cst_4 = arith.constant 0.13333334 : f32
    %24 = vector.broadcast %cst_4 : f32 to vector<1x256xf32>
    %25 = arith.mulf %23, %24 : vector<1x256xf32>
    %cst_5 = arith.constant 1.000000e+00 : f32
    %26 = vector.broadcast %cst_5 : f32 to vector<1x256xf32>
    %27 = arith.subf %25, %26 : vector<1x256xf32>
    %28 = vector.broadcast %0 : f32 to vector<1x256xf32>
    %29 = arith.subf %22, %28 : vector<1x256xf32>
    %30 = vector.broadcast %3 : f32 to vector<1x256xf32>
    %31 = arith.mulf %29, %30 : vector<1x256xf32>
    %32 = vector.broadcast %1 : f32 to vector<1x256xf32>
    %33 = arith.subf %27, %32 : vector<1x256xf32>
    %34 = vector.broadcast %3 : f32 to vector<1x256xf32>
    %35 = arith.mulf %33, %34 : vector<1x256xf32>
    %36 = arith.mulf %31, %31 : vector<1x256xf32>
    %37 = arith.mulf %35, %35 : vector<1x256xf32>
    %38 = arith.addf %36, %37 : vector<1x256xf32>
    %cst_6 = arith.constant 0.000000e+00 : f32
    %39 = vector.broadcast %cst_6 : f32 to vector<1x256xf32>
    %40 = arith.subf %39, %38 : vector<1x256xf32>
    %41 = math.exp %40 : vector<1x256xf32>
    %c0_7 = arith.constant 0 : index
    %42 = memref.load %arg3[%c0_7] : memref<3xf32, #tpu.memory_space<smem>>
    %43 = arith.mulf %42, %5 : f32
    %44 = vector.broadcast %43 : f32 to vector<1x256xf32>
    %45 = arith.mulf %44, %41 : vector<1x256xf32>
    %c0_8 = arith.constant 0 : index
    %c0_9 = arith.constant 0 : index
    %c0_10 = arith.constant 0 : index
    %46 = vector.load %arg4[%c0_8, %c0_9, %c0_10] : memref<3x1x256xf32, #tpu.memory_space<vmem>>, vector<1x1x256xf32>
    %47 = vector.shape_cast %46 : vector<1x1x256xf32> to vector<1x256xf32>
    %48 = vector.shape_cast %45 : vector<1x256xf32> to vector<1x1x256xf32>
    tpu.vector_store %arg4[%c0_8, %c0_9, %c0_10], %48 {strides = array<i32>} : memref<3x1x256xf32, #tpu.memory_space<vmem>>, vector<1x1x256xf32>,
    %c1_11 = arith.constant 1 : index
    %49 = memref.load %arg3[%c1_11] : memref<3xf32, #tpu.memory_space<smem>>
    %50 = arith.mulf %49, %5 : f32
    %51 = vector.broadcast %50 : f32 to vector<1x256xf32>
    %52 = arith.mulf %51, %41 : vector<1x256xf32>
    %c1_12 = arith.constant 1 : index
    %c0_13 = arith.constant 0 : index
    %c0_14 = arith.constant 0 : index
    %53 = vector.load %arg4[%c1_12, %c0_13, %c0_14] : memref<3x1x256xf32, #tpu.memory_space<vmem>>, vector<1x1x256xf32>
    %54 = vector.shape_cast %53 : vector<1x1x256xf32> to vector<1x256xf32>
    %55 = vector.shape_cast %52 : vector<1x256xf32> to vector<1x1x256xf32>
    tpu.vector_store %arg4[%c1_12, %c0_13, %c0_14], %55 {strides = array<i32>} : memref<3x1x256xf32, #tpu.memory_space<vmem>>, vector<1x1x256xf32>,
    %c2 = arith.constant 2 : index
    %56 = memref.load %arg3[%c2] : memref<3xf32, #tpu.memory_space<smem>>
    %57 = arith.mulf %56, %5 : f32
    %58 = vector.broadcast %57 : f32 to vector<1x256xf32>
    %59 = arith.mulf %58, %41 : vector<1x256xf32>
    %c2_15 = arith.constant 2 : index
    %c0_16 = arith.constant 0 : index
    %c0_17 = arith.constant 0 : index
    %60 = vector.load %arg4[%c2_15, %c0_16, %c0_17] : memref<3x1x256xf32, #tpu.memory_space<vmem>>, vector<1x1x256xf32>
    %61 = vector.shape_cast %60 : vector<1x1x256xf32> to vector<1x256xf32>
    %62 = vector.shape_cast %59 : vector<1x256xf32> to vector<1x1x256xf32>
    tpu.vector_store %arg4[%c2_15, %c0_16, %c0_17], %62 {strides = array<i32>} : memref<3x1x256xf32, #tpu.memory_space<vmem>>, vector<1x1x256xf32>,
    return
  }
  func.func @transform_0(%arg0: i32) -> i32 {
    %c0_i32 = arith.constant 0 : i32
    %c0_i32_0 = arith.constant 0 : i32
    return %c0_i32 : i32
  }
  func.func @transform_1(%arg0: i32) -> i32 {
    %c0_i32 = arith.constant 0 : i32
    %c0_i32_0 = arith.constant 0 : i32
    return %c0_i32 : i32
  }
  func.func @transform_2(%arg0: i32) -> i32 {
    %c0_i32 = arith.constant 0 : i32
    %c0_i32_0 = arith.constant 0 : i32
    return %c0_i32 : i32
  }
  func.func @transform_3(%arg0: i32) -> (i32, i32, i32) {
    %c0_i32 = arith.constant 0 : i32
    %c0_i32_0 = arith.constant 0 : i32
    %c0_i32_1 = arith.constant 0 : i32
    return %c0_i32, %arg0, %c0_i32_0 : i32, i32, i32
  }
}

</mosaic_0001>

<llo_original>
// kernel: tpu_custom_call.1
$region0: #{tpu_custom_call.1}
  #allocation0 [shape = 'u32[]', space=smem, size = 0x4, offset = 0x4, fixed_abs, tag = 'smem constant byte address 0x4 - core index']
  #allocation1 [shape = 'u32[144,128]{1,0:T(1,128)}', space=vmem, size = 0x12000, scoped, tag = 'internal scratch']
  #allocation2 [shape = 'f32[1]{0:T(128)S(6)}', space=smem, size = 0x200, scoped, tag = 'scoped memory for tpu_custom_call.1']
  %s0 = inlined_call_operand.vmem [shape: f32[2], index: 0, kind: input, shape index: {}]
  %s1 = inlined_call_operand.<no memory space> [shape: f32[1], index: 1, kind: input, shape index: {}]
  %s2 = inlined_call_operand.vmem [shape: f32[3], index: 2, kind: input, shape index: {}]
  %s3 = inlined_call_operand.hbm [shape: f32[3,1,256], index: 3, kind: output, shape index: {}]
  %s4 = sld [smem:[#allocation0]]
  $region30: #{tpu_custom_call.1} parent=0
    _
  %s6 = ssub.s32 1, %s4
  %s7 = scalar_select 0, %s6, %s4
  %8 = sst [smem:[#allocation2]] %s1
  $region1: #{tpu_custom_call.1} parent=0
    #allocation3 [shape = 'u8[512]{0}', space=smem, size = 0x200, scoped, tag = 'input window, operand 0, single buffered']
    #allocation4 [shape = 's32[1]{0}', space=sflag, size = 0x4, scoped, tag = 'scoped memory for tpu_custom_call.1']
    #allocation5 [shape = 's32[1]{0}', space=sflag, size = 0x4, scoped, tag = 'scoped memory for tpu_custom_call.1']
    #allocation6 [shape = 'u8[512]{0}', space=smem, size = 0x200, scoped, tag = 'input window, operand 2, single buffered']
    #allocation7 [shape = 's32[1]{0}', space=sflag, size = 0x4, scoped, tag = 'scoped memory for tpu_custom_call.1']
    #allocation8 [shape = 'u8[3072]{0}', space=vmem, size = 0xc00, scoped, tag = 'output window, operand 0, single buffered']
    %9 = vsyncpa [#allocation5], 0
    %10 = vsyncpa [#allocation7], 0
    %11 = vsyncpa [#allocation4], 0
    // Predicated region
    $region2: #{tpu_custom_call.1} parent=1 // pred_check
      _
    $region3: #{tpu_custom_call.1} parent=1 // pred_check_branch
      %13 = sbr.rel (0) target = $region5
    $region4: #{tpu_custom_call.1} parent=1 // pred_region
      %s15 = ssub.s32 16, 16
      %16 = vsyncadd [#allocation5], %s15
      %s18 = sshll.u32 %s0, 4
      %s19 = int_to_ptr.vmem [resolvable:$true] %s18
      %21 = dma.vmem_to_smem %s19, 16, [#allocation3], [#allocation5]
    $region5: #{tpu_custom_call.1} parent=1 // pred_fallthru
      _
    // Predicated region
    $region6: #{tpu_custom_call.1} parent=1 // pred_check
      _
    $region7: #{tpu_custom_call.1} parent=1 // pred_check_branch
      %23 = sbr.rel (0) target = $region9
    $region8: #{tpu_custom_call.1} parent=1 // pred_region
      _
    $region9: #{tpu_custom_call.1} parent=1 // pred_fallthru
      _
    // Predicated region
    $region10: #{tpu_custom_call.1} parent=1 // pred_check
      _
    $region11: #{tpu_custom_call.1} parent=1 // pred_check_branch
      %25 = sbr.rel (0) target = $region13
    $region12: #{tpu_custom_call.1} parent=1 // pred_region
      %s27 = ssub.s32 16, 16
      %28 = vsyncadd [#allocation7], %s27
      %s30 = sshll.u32 %s2, 4
      %s31 = int_to_ptr.vmem [resolvable:$true] %s30
      %33 = dma.vmem_to_smem %s31, 16, [#allocation6], [#allocation7]
    $region13: #{tpu_custom_call.1} parent=1 // pred_fallthru
      _
    // Predicated region
    $region14: #{tpu_custom_call.1} parent=1 // pred_check
      _
    $region15: #{tpu_custom_call.1} parent=1 // pred_check_branch
      %35 = sbr.rel (0) target = $region17
    $region16: #{tpu_custom_call.1} parent=1 // pred_region
      %36 = dma.done [#allocation5], 16
    $region17: #{tpu_custom_call.1} parent=1 // pred_fallthru
      _
    // Predicated region
    $region18: #{tpu_custom_call.1} parent=1 // pred_check
      _
    $region19: #{tpu_custom_call.1} parent=1 // pred_check_branch
      %38 = sbr.rel (0) target = $region21
    $region20: #{tpu_custom_call.1} parent=1 // pred_region
      %39 = dma.done [#allocation7], 16
    $region21: #{tpu_custom_call.1} parent=1 // pred_fallthru
      _
    %40 = sfence
    %s41 = sld [smem:[#allocation3]]
    %s42 = sld [smem:[#allocation3 + $0x1]]
    %s43 = sld [smem:[#allocation2]]
    %v44 = vstv %s43
    %v45 = vrcp.pop %v44
    %s46 = vtos %v45
    %s47 = smul.f32 %s46, %s46
    %s48 = smul.f32 %s47, 0.16666667
    %v49 = vlaneseq
    %v50 = vshrl.u32 %v49, 7
    %v51 = vlaneseq
    %v52 = vand.u32 %v51, 127
    %v53 = vadd.s32 %v52, 128
    %v54 = vstv 0
    %v55 = vadd.s32 %v54, %v50
    %v56 = vmul.u32 %v55, 256
    %v57 = vadd.s32 %v56, %v52
    %v58 = vadd.s32 %v56, %v53
    %v59 = vshra.s32 %v57, 4
    %v60 = vshra.s32 %v58, 4
    %v61 = vand.u32 %v57, 15
    %v62 = vand.u32 %v58, 15
    %v63 = vcvt.s32.f32 %v59
    %v64 = vcvt.s32.f32 %v60
    %v65 = vmul.f32 %v63, 0.13333334
    %v66 = vmul.f32 %v64, 0.13333334
    %v67 = vsub.f32 %v65, 1.0
    %v68 = vsub.f32 %v66, 1.0
    %v69 = vcvt.s32.f32 %v61
    %v70 = vcvt.s32.f32 %v62
    %v71 = vmul.f32 %v69, 0.13333334
    %v72 = vmul.f32 %v70, 0.13333334
    %v73 = vsub.f32 %v71, 1.0
    %v74 = vsub.f32 %v72, 1.0
    %v75 = vstv %s41
    %v76 = vsub.f32 %v67, %v75
    %v77 = vsub.f32 %v68, %v75
    %v78 = vstv %s46
    %v79 = vmul.f32 %v76, %v78
    %v80 = vmul.f32 %v77, %v78
    %v81 = vstv %s42
    %v82 = vsub.f32 %v73, %v81
    %v83 = vsub.f32 %v74, %v81
    %v84 = vmul.f32 %v82, %v78
    %v85 = vmul.f32 %v83, %v78
    %v86 = vmul.f32 %v79, %v79
    %v87 = vmul.f32 %v80, %v80
    %v88 = vmul.f32 %v84, %v84
    %v89 = vmul.f32 %v85, %v85
    %v90 = vadd.f32 %v86, %v88
    %v91 = vadd.f32 %v87, %v89
    %v92 = vsub.f32 0.0, %v90
    %v93 = vsub.f32 0.0, %v91
    %v94 = vmul.f32 %v92, 1.442695
    %v95 = vpow.pop %v94
    %v96 = vmul.f32 %v93, 1.442695
    %v97 = vpow.pop %v96
    %s98 = sld [smem:[#allocation6]]
    %s99 = smul.f32 %s98, %s48
    %v100 = vstv %s99
    %v101 = vmul.f32 %v100, %v95
    %v102 = vmul.f32 %v100, %v97
    %v105 = vcombine.low %v101, %v102
    %v107 = vunpack.c.l.s4 1966171168
    %v108 = vunpack.c.0.s8 %v107
    %v109 = vlaneseq
    %v110 = vshrl.u32 %v109, 7
    %v111 = vsub.s32 %v108, %v110
    %v112 = vrot.slane %v105, %v111
    %v114 = vunpack.c.l.s4 1966171168
    %v115 = vunpack.c.0.s8 %v114
    %v116 = vlaneseq
    %v117 = vshrl.u32 %v116, 7
    %v118 = vsub.s32 %v115, %v117
    %v119 = vrot.slane %v112, %v118
    %v121 = vlaneseq
    %vm122 = vcmp.ge.s32.totalorder %v121, 0
    %vm123 = vcmp.lt.s32.totalorder %v121, 256
    %vm124 = vmand %vm122, %vm123
    %125 = vst.msk [vmem:[#allocation8] sm:$0x3] %vm124, %v119
    %s126 = sld [smem:[#allocation6 + $0x1]]
    %s127 = smul.f32 %s126, %s48
    %v128 = vstv %s127
    %v129 = vmul.f32 %v128, %v95
    %v130 = vmul.f32 %v128, %v97
    %v133 = vcombine.low %v129, %v130
    %v135 = vunpack.c.l.s4 1966171168
    %v136 = vunpack.c.0.s8 %v135
    %v137 = vlaneseq
    %v138 = vshrl.u32 %v137, 7
    %v139 = vsub.s32 %v136, %v138
    %v140 = vrot.slane %v133, %v139
    %v142 = vunpack.c.l.s4 1966171168
    %v143 = vunpack.c.0.s8 %v142
    %v144 = vlaneseq
    %v145 = vshrl.u32 %v144, 7
    %v146 = vsub.s32 %v143, %v145
    %v147 = vrot.slane %v140, %v146
    %s149 = scalar_lea.vmem [#allocation8], 2
    %150 = vst.msk [vmem:[%s149] sm:$0x3] %vm124, %v147
    %s151 = sld [smem:[#allocation6 + $0x2]]
    %s152 = smul.f32 %s151, %s48
    %v153 = vstv %s152
    %v154 = vmul.f32 %v153, %v95
    %v155 = vmul.f32 %v153, %v97
    %v158 = vcombine.low %v154, %v155
    %v160 = vunpack.c.l.s4 1966171168
    %v161 = vunpack.c.0.s8 %v160
    %v162 = vlaneseq
    %v163 = vshrl.u32 %v162, 7
    %v164 = vsub.s32 %v161, %v163
    %v165 = vrot.slane %v158, %v164
    %v167 = vunpack.c.l.s4 1966171168
    %v168 = vunpack.c.0.s8 %v167
    %v169 = vlaneseq
    %v170 = vshrl.u32 %v169, 7
    %v171 = vsub.s32 %v168, %v170
    %v172 = vrot.slane %v165, %v171
    %s174 = scalar_lea.vmem [#allocation8], 4
    %175 = vst.msk [vmem:[%s174] sm:$0x3] %vm124, %v172
    // Predicated region
    $region22: #{tpu_custom_call.1} parent=1 // pred_check
      _
    $region23: #{tpu_custom_call.1} parent=1 // pred_check_branch
      %177 = sbr.rel (0) target = $region25
    $region24: #{tpu_custom_call.1} parent=1 // pred_region
      %s179 = ssub.s32 96, 96
      %180 = vsyncadd [#allocation4], %s179
      %s181 = sshll.u32 [#allocation8], 4
      %s182 = int_to_ptr.vmem [resolvable:$true] %s181
      %187 = dma.vmem_to_hbm [thread:$0]  %s182, 96, %s3, [#allocation4], 32, 32, 2
    $region25: #{tpu_custom_call.1} parent=1 // pred_fallthru
      _
    // Predicated region
    $region26: #{tpu_custom_call.1} parent=1 // pred_check
      _
    $region27: #{tpu_custom_call.1} parent=1 // pred_check_branch
      %189 = sbr.rel (0) target = $region29
    $region28: #{tpu_custom_call.1} parent=1 // pred_region
      %190 = dma.done [#allocation4], 96
    $region29: #{tpu_custom_call.1} parent=1 // pred_fallthru
      _
    %191 = vsyncpa [#allocation4], 1
    %192 = vsyncpa [#allocation5], 1
    %193 = vsyncpa [#allocation7], 1

</llo_original>
